<compile_context>
chip_gen: v7x
topology: tpu7x:2x2x1
jax: 0.10.0
libtpu: 0.0.40
codegen_flags: <defaults>
</compile_context>

<pallas_src>
import jax
import jax.numpy as jnp
from jax.experimental import pallas as pl
from jax.experimental.pallas import tpu as pltpu


def _round_up(x: int, m: int) -> int:
    return ((x + m - 1) // m) * m


def _vmem_limit_bytes() -> int:
    """Generation-aware scoped-VMEM limit (conservative fallback)."""
    cap = None
    try:
        info = pltpu.get_tpu_info()
        cap = getattr(info, "vmem_capacity_bytes", None)
    except Exception:
        cap = None
    if cap is None:
        return 48 * 1024 * 1024          # safe on v5e/v6e (128 MiB) and v7x (64 MiB)
    if cap <= 64 * 1024 * 1024:          # v7x-class: 64 MiB per core, leave headroom
        return 40 * 1024 * 1024
    return 96 * 1024 * 1024              # v5e/v6e: 128 MiB physical


def _pick_block_rows(N: int, C: int, itemsize: int, num_splits: int,
                     vmem_limit: int) -> int:
    """Largest row tile whose live VMEM (input double-buffers + f32 temps) fits."""
    mult = 8 if itemsize >= 4 else 16
    # 2 inputs x 2 pipeline buffers (native dtype) + ~4 block-sized f32 temps.
    per_row = 4 * C * itemsize + 4 * C * 4
    budget = max(vmem_limit - 8 * 1024 * 1024, 4 * 1024 * 1024)
    bn = max(mult, (budget // per_row) // mult * mult)
    # Never more rows per block than one core's share of the batch.
    rows_per_split = pl.cdiv(N, num_splits)
    bn = min(bn, _round_up(rows_per_split, mult))
    return int(bn)


def _kd_loss_kernel(T: float, n_total: int, block_rows: int,
                    blocks_per_split: int, maybe_ragged: bool):
    """Kernel factory closed over temperature, batch size and tiling."""
    inv_T = 1.0 / float(T)
    scale = (float(T) * float(T)) / float(n_total)   # T^2 / N  ('batchmean')

    def kernel(s_ref, t_ref, o_ref, acc_ref):
        c = pl.program_id(0)          # core split index ("parallel")
        j = pl.program_id(1)          # block within this split ("arbitrary")

        @pl.when(j == 0)
        def _init():
            acc_ref[0, 0] = jnp.float32(0.0)

        # Upcast + temperature scale once; everything below is f32.
        s = s_ref[...].astype(jnp.float32) * inv_T
        t = t_ref[...].astype(jnp.float32) * inv_T
        row_start = (c * blocks_per_split + j) * block_rows

        def block_kl(s_blk, t_blk, masked: bool):
            if masked:
                row_ids = (jax.lax.broadcasted_iota(jnp.int32, (block_rows, 1), 0)
                           + row_start)
                row_mask = row_ids < n_total
                # Zero padded/garbage rows so exp/log stay finite (they give 0).
                s_blk = jnp.where(row_mask, s_blk, 0.0)
                t_blk = jnp.where(row_mask, t_blk, 0.0)

            # Student log-softmax pieces.
            s_sh = s_blk - jnp.max(s_blk, axis=1, keepdims=True)
            lse_s = jnp.log(jnp.sum(jnp.exp(s_sh), axis=1, keepdims=True))
            # Teacher softmax pieces.
            t_sh = t_blk - jnp.max(t_blk, axis=1, keepdims=True)
            e_t = jnp.exp(t_sh)
            sum_t = jnp.sum(e_t, axis=1, keepdims=True)
            # sum_c p_t (log p_t - log p_s)
            #   = [ sum_c e_t (t_sh - s_sh) + sum_t (lse_s - log sum_t) ] / sum_t
            inner = (jnp.sum(e_t * (t_sh - s_sh), axis=1, keepdims=True)
                     + sum_t * (lse_s - jnp.log(sum_t)))
            row_kl = inner * pl.reciprocal(sum_t, approx=False)
            if masked:
                row_kl = jnp.where(row_mask, row_kl, 0.0)
            return jnp.sum(row_kl)

        if maybe_ragged:
            blk = jax.lax.cond(
                row_start + block_rows > n_total,
                lambda a, b: block_kl(a, b, True),
                lambda a, b: block_kl(a, b, False),
                s, t)
        else:
            blk = block_kl(s, t, False)

        acc_ref[0, 0] += blk

        @pl.when(j == pl.num_programs(1) - 1)
        def _finalize():
            # Write this core's partial (already scaled) into [0, 0] of its own
            # (8, 128) output block; everything else is zero so the wrapper can
            # simply jnp.sum the output.
            r = jax.lax.broadcasted_iota(jnp.int32, (8, 128), 0)
            l = jax.lax.broadcasted_iota(jnp.int32, (8, 128), 1)
            o_ref[...] = jnp.where((r == 0) & (l == 0),
                                   acc_ref[0, 0] * scale,
                                   jnp.float32(0.0))

    return kernel


def kd_loss(out_s: jax.Array, out_t: jax.Array, T: float,
            block_rows: int | None = None) -> jax.Array:
    """KD loss. out_s, out_t: (N, C) logits (f32 or bf16). Returns f32 scalar."""
    assert out_s.shape == out_t.shape and out_s.ndim == 2
    N, C = out_s.shape
    itemsize = max(jnp.dtype(out_s.dtype).itemsize,
                   jnp.dtype(out_t.dtype).itemsize)
    mult = 8 if itemsize >= 4 else 16          # sublane multiple for the row tile

    vmem_limit = _vmem_limit_bytes()

    # Two-way split across TensorCores (only pays off on v7x; harmless on
    # single-TC v5e/v6e where the "parallel" axis runs sequentially).
    num_splits = 2 if N > mult else 1

    if block_rows is None:
        block_rows = _pick_block_rows(N, C, itemsize, num_splits, vmem_limit)
    else:
        block_rows = int(_round_up(block_rows, mult))

    num_blocks = pl.cdiv(N, block_rows)
    if num_blocks < num_splits:
        num_splits = 1
    blocks_per_split = pl.cdiv(num_blocks, num_splits)
    # True if any tile can contain rows >= N (ragged last tile or the clamped
    # duplicate tile the 2-way split may introduce).
    maybe_ragged = (num_splits * blocks_per_split * block_rows) > N
    last_block = num_blocks - 1

    def in_map(c, j):
        # Clamp fully out-of-range block indices to the last valid block; their
        # contribution is masked to exactly zero inside the kernel.
        return (jnp.minimum(c * blocks_per_split + j, last_block), 0)

    out = pl.pallas_call(
        _kd_loss_kernel(T, N, block_rows, blocks_per_split, maybe_ragged),
        out_shape=jax.ShapeDtypeStruct((num_splits * 8, 128), jnp.float32),
        grid=(num_splits, blocks_per_split),
        in_specs=[
            pl.BlockSpec((block_rows, C), in_map),
            pl.BlockSpec((block_rows, C), in_map),
        ],
        out_specs=pl.BlockSpec((8, 128), lambda c, j: (c, 0)),
        scratch_shapes=[pltpu.SMEM((1, 1), jnp.float32)],
        compiler_params=pltpu.CompilerParams(
            dimension_semantics=("parallel", "arbitrary"),
            vmem_limit_bytes=int(vmem_limit),
        ),
    )(out_s, out_t)
    # Per-core partials live at [c*8, 0]; every other element is zero.
    return jnp.sum(out)


def _kd_loss_ref(out_s, out_t, T):
    """Pure-JAX reference matching the PyTorch module exactly."""
    s = out_s.astype(jnp.float32) / T
    t = out_t.astype(jnp.float32) / T
    log_p_s = jax.nn.log_softmax(s, axis=1)
    p_t = jax.nn.softmax(t, axis=1)
    log_p_t = jax.nn.log_softmax(t, axis=1)
    kl = p_t * (log_p_t - log_p_s)
    return jnp.sum(kl) / out_s.shape[0] * (T * T)


if __name__ == "__main__":
    key = jax.random.PRNGKey(0)
    k1, k2, k3, k4, k5, k6 = jax.random.split(key, 6)

    T = 4.0  # distillation temperature

    # Case 1: small batch, single block, single split.
    N1, C1 = 8, 32
    s1 = jax.random.normal(k1, (N1, C1), dtype=jnp.float32)
    t1 = jax.random.normal(k2, (N1, C1), dtype=jnp.float32)
    loss1 = jax.block_until_ready(kd_loss(s1, t1, T))
    ref1 = jax.block_until_ready(_kd_loss_ref(s1, t1, T))
    assert jnp.allclose(loss1, ref1, rtol=1e-5, atol=1e-5), (loss1, ref1)

    # Case 2: 2-way split, multi-block grid, ragged (masked) last tile and a
    # clamped duplicate tile (num_blocks odd).
    N2, C2 = 20, 32
    s2 = jax.random.normal(k3, (N2, C2), dtype=jnp.float32)
    t2 = jax.random.normal(k4, (N2, C2), dtype=jnp.float32)
    loss2 = jax.block_until_ready(kd_loss(s2, t2, T, block_rows=8))
    ref2 = jax.block_until_ready(_kd_loss_ref(s2, t2, T))
    assert jnp.allclose(loss2, ref2, rtol=1e-5, atol=1e-5), (loss2, ref2)

    # Case 3: bf16 logits (in-kernel upcast), default tiling, ragged split.
    N3, C3 = 48, 128
    s3 = jax.random.normal(k5, (N3, C3), dtype=jnp.float32).astype(jnp.bfloat16)
    t3 = jax.random.normal(k6, (N3, C3), dtype=jnp.float32).astype(jnp.bfloat16)
    loss3 = jax.block_until_ready(kd_loss(s3, t3, T))
    ref3 = jax.block_until_ready(_kd_loss_ref(s3, t3, T))
    assert jnp.allclose(loss3, ref3, rtol=1e-4, atol=1e-5), (loss3, ref3)

    print("KERNEL_OK")
</pallas_src>

<mosaic_0001>
module attributes {stable_mosaic.version = 11 : i64} {
  func.func @kernel(%arg0: i32, %arg1: i32, %arg2: memref<8x32xf32, #tpu.memory_space<vmem>>, %arg3: memref<8x32xf32, #tpu.memory_space<vmem>>, %arg4: memref<8x128xf32, #tpu.memory_space<vmem>>, %arg5: memref<1x1xf32, #tpu.memory_space<smem>>) attributes {dimension_semantics = [#tpu.dimension_semantics<parallel>, #tpu.dimension_semantics<arbitrary>], iteration_bounds = array<i64: 1, 1>, scalar_prefetch = 0 : i64, scratch_operands = 1 : i64, tpu.core_type = #tpu.core_type<tc>, window_params = [{transform_indices = @transform_0, window_bounds = array<i64: 8, 32>}, {transform_indices = @transform_1, window_bounds = array<i64: 8, 32>}, {transform_indices = @transform_2, window_bounds = array<i64: 8, 128>}]} {
    %c0_i32 = arith.constant 0 : i32
    %0 = arith.cmpi eq, %arg1, %c0_i32 : i32
    %1 = arith.extui %0 : i1 to i32
    %c0_i32_0 = arith.constant 0 : i32
    %2 = arith.cmpi ne, %1, %c0_i32_0 : i32
    scf.if %2 {
      %cst_17 = arith.constant 0.000000e+00 : f32
      %c0_18 = arith.constant 0 : index
      %c0_19 = arith.constant 0 : index
      %44 = memref.load %arg5[%c0_18, %c0_19] : memref<1x1xf32, #tpu.memory_space<smem>>
      memref.store %cst_17, %arg5[%c0_18, %c0_19] : memref<1x1xf32, #tpu.memory_space<smem>>
    } else {
    }
    %c0 = arith.constant 0 : index
    %c0_1 = arith.constant 0 : index
    %3 = vector.load %arg2[%c0, %c0_1] : memref<8x32xf32, #tpu.memory_space<vmem>>, vector<8x32xf32>
    %cst = arith.constant 2.500000e-01 : f32
    %4 = vector.broadcast %cst : f32 to vector<8x32xf32>
    %5 = arith.mulf %3, %4 : vector<8x32xf32>
    %c0_2 = arith.constant 0 : index
    %c0_3 = arith.constant 0 : index
    %6 = vector.load %arg3[%c0_2, %c0_3] : memref<8x32xf32, #tpu.memory_space<vmem>>, vector<8x32xf32>
    %cst_4 = arith.constant 2.500000e-01 : f32
    %7 = vector.broadcast %cst_4 : f32 to vector<8x32xf32>
    %8 = arith.mulf %6, %7 : vector<8x32xf32>
    %cst_5 = arith.constant dense<0xFF800000> : vector<8xf32>
    %9 = vector.multi_reduction <maximumf>, %5, %cst_5 [1] : vector<8x32xf32> to vector<8xf32>
    %10 = vector.shape_cast %9 : vector<8xf32> to vector<8x1xf32>
    %11 = vector.broadcast %10 : vector<8x1xf32> to vector<8x32xf32>
    %12 = arith.subf %5, %11 : vector<8x32xf32>
    %13 = math.exp %12 : vector<8x32xf32>
    %cst_6 = arith.constant dense<0.000000e+00> : vector<8xf32>
    %14 = vector.multi_reduction <add>, %13, %cst_6 [1] : vector<8x32xf32> to vector<8xf32>
    %15 = vector.shape_cast %14 : vector<8xf32> to vector<8x1xf32>
    %16 = math.log %15 : vector<8x1xf32>
    %cst_7 = arith.constant dense<0xFF800000> : vector<8xf32>
    %17 = vector.multi_reduction <maximumf>, %8, %cst_7 [1] : vector<8x32xf32> to vector<8xf32>
    %18 = vector.shape_cast %17 : vector<8xf32> to vector<8x1xf32>
    %19 = vector.broadcast %18 : vector<8x1xf32> to vector<8x32xf32>
    %20 = arith.subf %8, %19 : vector<8x32xf32>
    %21 = math.exp %20 : vector<8x32xf32>
    %cst_8 = arith.constant dense<0.000000e+00> : vector<8xf32>
    %22 = vector.multi_reduction <add>, %21, %cst_8 [1] : vector<8x32xf32> to vector<8xf32>
    %23 = vector.shape_cast %22 : vector<8xf32> to vector<8x1xf32>
    %24 = arith.subf %20, %12 : vector<8x32xf32>
    %25 = arith.mulf %21, %24 : vector<8x32xf32>
    %cst_9 = arith.constant dense<0.000000e+00> : vector<8xf32>
    %26 = vector.multi_reduction <add>, %25, %cst_9 [1] : vector<8x32xf32> to vector<8xf32>
    %27 = vector.shape_cast %26 : vector<8xf32> to vector<8x1xf32>
    %28 = math.log %23 : vector<8x1xf32>
    %29 = arith.subf %16, %28 : vector<8x1xf32>
    %30 = arith.mulf %23, %29 : vector<8x1xf32>
    %31 = arith.addf %27, %30 : vector<8x1xf32>
    %32 = tpu.reciprocal %23 : vector<8x1xf32> -> vector<8x1xf32>
    %33 = arith.mulf %31, %32 : vector<8x1xf32>
    %34 = vector.shape_cast %33 : vector<8x1xf32> to vector<1x8x1xf32>
    %cst_10 = arith.constant dense<0.000000e+00> : vector<1xf32>
    %35 = vector.multi_reduction <add>, %34, %cst_10 [1, 2] : vector<1x8x1xf32> to vector<1xf32>
    %36 = vector.shape_cast %35 : vector<1xf32> to vector<1x1x1xf32>
    %37 = vector.extract %36[0, 0, 0] : f32 from vector<1x1x1xf32>
    %c0_11 = arith.constant 0 : index
    %c0_12 = arith.constant 0 : index
    %38 = memref.load %arg5[%c0_11, %c0_12] : memref<1x1xf32, #tpu.memory_space<smem>>
    %39 = arith.addf %38, %37 : f32
    %c0_13 = arith.constant 0 : index
    %c0_14 = arith.constant 0 : index
    %40 = memref.load %arg5[%c0_13, %c0_14] : memref<1x1xf32, #tpu.memory_space<smem>>
    memref.store %39, %arg5[%c0_13, %c0_14] : memref<1x1xf32, #tpu.memory_space<smem>>
    %c0_i32_15 = arith.constant 0 : i32
    %41 = arith.cmpi eq, %arg1, %c0_i32_15 : i32
    %42 = arith.extui %41 : i1 to i32
    %c0_i32_16 = arith.constant 0 : i32
    %43 = arith.cmpi ne, %42, %c0_i32_16 : i32
    scf.if %43 {
      %44 = tpu.iota {dimensions = array<i32: 0>} : vector<8x128xi32>
      %45 = tpu.iota {dimensions = array<i32: 1>} : vector<8x128xi32>
      %c0_i32_17 = arith.constant 0 : i32
      %46 = vector.broadcast %c0_i32_17 : i32 to vector<8x128xi32>
      %47 = arith.cmpi eq, %44, %46 : vector<8x128xi32>
      %c0_i32_18 = arith.constant 0 : i32
      %48 = vector.broadcast %c0_i32_18 : i32 to vector<8x128xi32>
      %49 = arith.cmpi eq, %45, %48 : vector<8x128xi32>
      %50 = arith.andi %47, %49 : vector<8x128xi1>
      %c0_19 = arith.constant 0 : index
      %c0_20 = arith.constant 0 : index
      %51 = memref.load %arg5[%c0_19, %c0_20] : memref<1x1xf32, #tpu.memory_space<smem>>
      %cst_21 = arith.constant 2.000000e+00 : f32
      %52 = arith.mulf %51, %cst_21 : f32
      %cst_22 = arith.constant 0.000000e+00 : f32
      %53 = vector.broadcast %52 : f32 to vector<8x128xf32>
      %54 = vector.broadcast %cst_22 : f32 to vector<8x128xf32>
      %55 = arith.select %50, %53, %54 : vector<8x128xi1>, vector<8x128xf32>
      %c0_23 = arith.constant 0 : index
      %c0_24 = arith.constant 0 : index
      %56 = vector.load %arg4[%c0_23, %c0_24] : memref<8x128xf32, #tpu.memory_space<vmem>>, vector<8x128xf32>
      tpu.vector_store %arg4[%c0_23, %c0_24], %55 {strides = array<i32>} : memref<8x128xf32, #tpu.memory_space<vmem>>, vector<8x128xf32>,
    } else {
    }
    return
  }
  func.func @transform_0(%arg0: i32, %arg1: i32) -> (i32, i32) {
    %c1_i32 = arith.constant 1 : i32
    %0 = arith.muli %arg0, %c1_i32 : i32
    %1 = arith.addi %0, %arg1 : i32
    %c0_i32 = arith.constant 0 : i32
    %2 = arith.minsi %1, %c0_i32 : i32
    %c0_i32_0 = arith.constant 0 : i32
    %c0_i32_1 = arith.constant 0 : i32
    return %2, %c0_i32_0 : i32, i32
  }
  func.func @transform_1(%arg0: i32, %arg1: i32) -> (i32, i32) {
    %c1_i32 = arith.constant 1 : i32
    %0 = arith.muli %arg0, %c1_i32 : i32
    %1 = arith.addi %0, %arg1 : i32
    %c0_i32 = arith.constant 0 : i32
    %2 = arith.minsi %1, %c0_i32 : i32
    %c0_i32_0 = arith.constant 0 : i32
    %c0_i32_1 = arith.constant 0 : i32
    return %2, %c0_i32_0 : i32, i32
  }
  func.func @transform_2(%arg0: i32, %arg1: i32) -> (i32, i32) {
    %c0_i32 = arith.constant 0 : i32
    %c0_i32_0 = arith.constant 0 : i32
    return %arg0, %c0_i32 : i32, i32
  }
}

</mosaic_0001>

<llo_original>
// kernel: tpu_custom_call.1
$region0: #{tpu_custom_call.1}
  #allocation0 [shape = 'u32[]', space=smem, size = 0x4, offset = 0x4, fixed_abs, tag = 'smem constant byte address 0x4 - core index']
  #allocation1 [shape = 'u32[144,128]{1,0:T(1,128)}', space=vmem, size = 0x12000, scoped, tag = 'internal scratch']
  #allocation2 [shape = 'f32[1,1]{1,0:T(1,128)}', space=smem, size = 0x200, scoped, tag = 'scratch operand']
  %s0 = inlined_call_operand.hbm [shape: f32[8,32], index: 0, kind: input, shape index: {}]
  %s1 = inlined_call_operand.hbm [shape: f32[8,32], index: 1, kind: input, shape index: {}]
  %s2 = inlined_call_operand.hbm [shape: f32[8,128], index: 2, kind: output, shape index: {}]
  %s3 = sld [smem:[#allocation0]]
  $region34: #{tpu_custom_call.1} parent=0
    _
  %s5 = ssub.s32 1, %s3
  %s6 = scalar_select 0, %s5, %s3
  $region1: #{tpu_custom_call.1} parent=0
    #allocation3 [shape = 'u8[4096]{0}', space=vmem, size = 0x1000, scoped, tag = 'input window, operand 0, single buffered']
    #allocation4 [shape = 's32[1]{0}', space=sflag, size = 0x4, scoped, tag = 'scoped memory for tpu_custom_call.1']
    #allocation5 [shape = 's32[1]{0}', space=sflag, size = 0x4, scoped, tag = 'scoped memory for tpu_custom_call.1']
    #allocation6 [shape = 'u8[4096]{0}', space=vmem, size = 0x1000, scoped, tag = 'input window, operand 1, single buffered']
    #allocation7 [shape = 's32[1]{0}', space=sflag, size = 0x4, scoped, tag = 'scoped memory for tpu_custom_call.1']
    #allocation8 [shape = 'u8[4096]{0}', space=vmem, size = 0x1000, scoped, tag = 'output window, operand 0, single buffered']
    %7 = vsyncpa [#allocation4], 0
    %8 = vsyncpa [#allocation7], 0
    %9 = vsyncpa [#allocation5], 0
    // Predicated region
    $region2: #{tpu_custom_call.1} parent=1 // pred_check
      _
    $region3: #{tpu_custom_call.1} parent=1 // pred_check_branch
      %11 = sbr.rel (0) target = $region5
    $region4: #{tpu_custom_call.1} parent=1 // pred_region
      %s12 = sadd.s32 0, 0
      %p13 = scmp.lt.s32.totalorder %s12, 0
      %s14 = scalar_select %p13, %s12, 0
      %s16 = ssub.s32 128, 128
      %17 = vsyncadd [#allocation4], %s16
      %s18 = smul.addr %s14, 128
      %s19 = scalar_lea.hbm %s0, %s18
      %s21 = sshll.u32 [#allocation3], 4
      %s22 = int_to_ptr.vmem [resolvable:$true] %s21
      %24 = dma.hbm_to_vmem [thread:$0]  %s19, 128, %s22, [#allocation4]
    $region5: #{tpu_custom_call.1} parent=1 // pred_fallthru
      _
    // Predicated region
    $region6: #{tpu_custom_call.1} parent=1 // pred_check
      _
    $region7: #{tpu_custom_call.1} parent=1 // pred_check_branch
      %26 = sbr.rel (0) target = $region9
    $region8: #{tpu_custom_call.1} parent=1 // pred_region
      %s27 = sadd.s32 0, 0
      %p28 = scmp.lt.s32.totalorder %s27, 0
      %s29 = scalar_select %p28, %s27, 0
      %s31 = ssub.s32 128, 128
      %32 = vsyncadd [#allocation7], %s31
      %s33 = smul.addr %s29, 128
      %s34 = scalar_lea.hbm %s1, %s33
      %s36 = sshll.u32 [#allocation6], 4
      %s37 = int_to_ptr.vmem [resolvable:$true] %s36
      %39 = dma.hbm_to_vmem [thread:$0]  %s34, 128, %s37, [#allocation7]
    $region9: #{tpu_custom_call.1} parent=1 // pred_fallthru
      _
    // Predicated region
    $region10: #{tpu_custom_call.1} parent=1 // pred_check
      _
    $region11: #{tpu_custom_call.1} parent=1 // pred_check_branch
      %41 = sbr.rel (0) target = $region13
    $region12: #{tpu_custom_call.1} parent=1 // pred_region
      %42 = dma.done [#allocation4], 128
    $region13: #{tpu_custom_call.1} parent=1 // pred_fallthru
      _
    // Predicated region
    $region14: #{tpu_custom_call.1} parent=1 // pred_check
      _
    $region15: #{tpu_custom_call.1} parent=1 // pred_check_branch
      %44 = sbr.rel (0) target = $region17
    $region16: #{tpu_custom_call.1} parent=1 // pred_region
      %45 = dma.done [#allocation7], 128
    $region17: #{tpu_custom_call.1} parent=1 // pred_fallthru
      _
    %s46 = sadd.s32 0, 0
    %p47 = scmp.lt.s32.totalorder %s46, 0
    %s48 = scalar_select %p47, %s46, 0
    %s49 = sadd.s32 0, 0
    %p50 = scmp.lt.s32.totalorder %s49, 0
    %s51 = scalar_select %p50, %s49, 0
    %p52 = scmp.eq.s32.totalorder 0, 0
    // Predicated region
    $region18: #{tpu_custom_call.1} parent=1 // pred_check
      %p53 = pneg %p52
    $region19: #{tpu_custom_call.1} parent=1 // pred_check_branch
      %55 = sbr.rel (%p53) target = $region21
    $region20: #{tpu_custom_call.1} parent=1 // pred_region
      %s56 = scalar_lea.smem [#allocation2], 0
      %57 = sst [smem:[%s56]] 0.0
    $region21: #{tpu_custom_call.1} parent=1 // pred_fallthru
      _
    %v58 = vld [vmem:[#allocation3] sm:$0xff]
    %v59 = vmul.f32 %v58, 0.25
    %v60 = vld [vmem:[#allocation6] sm:$0xff]
    %v61 = vmul.f32 %v60, 0.25
    %vm62 = vcmask 261120
    %v63 = vsel %vm62, %v59, -inf
    %64 = vmax.xlane.f32.xlu0 %v63
    %v65 = vpop.xlane.xlu0 %64
    %v66 = vsub.f32 %v59, %v65
    %v67 = vmul.f32 %v66, 1.442695
    %v68 = vpow.pop %v67
    %v69 = vsel %vm62, %v68, 0.0
    %70 = vadd.xlane.f32.xlu0 %v69
    %v71 = vpop.xlane.xlu0 %70
    %v72 = vlog2.pop %v71
    %v73 = vmul.f32 %v72, 0.6931472
    %v74 = vsel %vm62, %v61, -inf
    %75 = vmax.xlane.f32.xlu0 %v74
    %v76 = vpop.xlane.xlu0 %75
    %v77 = vsub.f32 %v61, %v76
    %v78 = vmul.f32 %v77, 1.442695
    %v79 = vpow.pop %v78
    %v80 = vsel %vm62, %v79, 0.0
    %81 = vadd.xlane.f32.xlu0 %v80
    %v82 = vpop.xlane.xlu0 %81
    %v83 = vsub.f32 %v77, %v66
    %v84 = vmul.f32 %v79, %v83
    %v85 = vsel %vm62, %v84, 0.0
    %86 = vadd.xlane.f32.xlu0 %v85
    %v87 = vpop.xlane.xlu0 %86
    %v88 = vlog2.pop %v82
    %v89 = vmul.f32 %v88, 0.6931472
    %v90 = vsub.f32 %v73, %v89
    %v91 = vmul.f32 %v82, %v90
    %v92 = vadd.f32 %v87, %v91
    %v93 = vrcp.pop %v82
    %v94 = vmul.f32 %v92, %v93
    %vm95 = vcmask 7168
    %v96 = vsel %vm95, %v94, 0.0
    %97 = vadd.xlane.f32.xlu0 %v96
    %v98 = vpop.xlane.xlu0 %97
    %v99 = vrot.slane %v98, 4
    %v100 = vadd.f32 %v98, %v99
    %v101 = vrot.slane %v100, 2
    %v102 = vadd.f32 %v100, %v101
    %v103 = vrot.slane %v102, 1
    %v104 = vadd.f32 %v102, %v103
    %s105 = vtos %v104
    %s106 = sld [smem:[#allocation2]]
    %s107 = sadd.f32 %s106, %s105
    %s108 = scalar_lea.smem [#allocation2], 0
    %109 = sst [smem:[%s108]] %s107
    // Predicated region
    $region22: #{tpu_custom_call.1} parent=1 // pred_check
      %p110 = pneg %p52
    $region23: #{tpu_custom_call.1} parent=1 // pred_check_branch
      %112 = sbr.rel (%p110) target = $region25
    $region24: #{tpu_custom_call.1} parent=1 // pred_region
      %v113 = vlaneseq
      %v114 = vshrl.u32 %v113, 7
      %v115 = vlaneseq
      %v116 = vand.u32 %v115, 127
      %vm117 = vcmp.eq.s32.totalorder %v114, 0
      %vm118 = vcmp.eq.s32.totalorder %v116, 0
      %vm119 = vmand %vm117, %vm118
      %s120 = sld [smem:[#allocation2]]
      %s121 = smul.f32 %s120, 2.0
      %v122 = vstv %s121
      %v123 = vsel %vm119, %v122, 0.0
      %124 = vst [vmem:[#allocation8] sm:$0xff] %v123
    $region25: #{tpu_custom_call.1} parent=1 // pred_fallthru
      _
    // Predicated region
    $region26: #{tpu_custom_call.1} parent=1 // pred_check
      _
    $region27: #{tpu_custom_call.1} parent=1 // pred_check_branch
      %126 = sbr.rel (0) target = $region29
    $region28: #{tpu_custom_call.1} parent=1 // pred_region
      %s128 = ssub.s32 128, 128
      %129 = vsyncadd [#allocation5], %s128
      %s131 = sshll.u32 [#allocation8], 4
      %s132 = int_to_ptr.vmem [resolvable:$true] %s131
      %134 = dma.vmem_to_hbm [thread:$0]  %s132, 128, %s2, [#allocation5]
    $region29: #{tpu_custom_call.1} parent=1 // pred_fallthru
      _
    // Predicated region
    $region30: #{tpu_custom_call.1} parent=1 // pred_check
      _
    $region31: #{tpu_custom_call.1} parent=1 // pred_check_branch
      %136 = sbr.rel (0) target = $region33
    $region32: #{tpu_custom_call.1} parent=1 // pred_region
      %137 = dma.done [#allocation5], 128
    $region33: #{tpu_custom_call.1} parent=1 // pred_fallthru
      _
    %138 = vsyncpa [#allocation4], 1
    %139 = vsyncpa [#allocation7], 1
    %140 = vsyncpa [#allocation5], 1

</llo_original>
